<compile_context>
chip_gen: v5e
topology: v5e:2x2
jax: 0.10.0
libtpu: 0.0.40
codegen_flags: <defaults>
</compile_context>

<pallas_src>
import jax
import jax.numpy as jnp
from jax.experimental import pallas as pl
from jax.experimental.pallas import tpu as pltpu

LANE = 128  # TPU lane width; action dim is padded to a multiple of this.


def pgn_kernel(x_ref, w1_ref, b1_ref, w2_ref, b2_ref, out_ref):
    # Layer 1: (tm, in) @ (in, H) on the MXU, f32 accumulate; bias+ReLU in f32.
    x = x_ref[...].astype(w1_ref.dtype)            # no-op when params are f32
    h = jnp.dot(x, w1_ref[...], preferred_element_type=jnp.float32)
    h = jnp.maximum(h + b1_ref[...], 0.0)          # f32 VPU (safe on v5e too)
    # Layer 2: (tm, H) @ (H, a_pad) -> lane-dense 128-wide logits tile.
    out = jnp.dot(h.astype(w2_ref.dtype), w2_ref[...],
                  preferred_element_type=jnp.float32)
    out_ref[...] = (out + b2_ref[...]).astype(out_ref.dtype)


def _pick_tm(batch):
    # One grid step for typical rollout batches; 256 rows/step beyond that
    # (fills the 256-wide MXU M dim on v6e/v7x, still fine on v5e).
    if batch <= 512:
        return max(8, ((batch + 7) // 8) * 8)
    return 256


def prepare_params(w1, b1, w2, b2, *, matmul_dtype=jnp.float32):
    """One-time parameter prep (call at init / after each optimizer step).

    Pads w2/b2 along the action dim to a multiple of 128 (lane-dense output
    store) and optionally casts the matmul weights to bf16.  Biases stay f32.
    """
    n_actions = w2.shape[1]
    a_pad = max(LANE, ((n_actions + LANE - 1) // LANE) * LANE)
    if a_pad != n_actions:
        w2 = jnp.pad(w2, ((0, 0), (0, a_pad - n_actions)))
        b2 = jnp.pad(b2, ((0, 0), (0, a_pad - n_actions)))
    w1 = w1.astype(matmul_dtype)
    w2 = w2.astype(matmul_dtype)
    b1 = b1.astype(jnp.float32)
    b2 = b2.astype(jnp.float32)
    return w1, b1, w2, b2


def pgn_forward_padded(x, w1, b1, w2p, b2p):
    """x: (B, in); pre-padded params from prepare_params -> (B, a_pad) f32 logits.

    Columns >= n_actions are exactly the padded-zero-weight logits; rows are
    exactly B (no batch padding materialized).
    """
    B, in_dim = x.shape
    hidden = w1.shape[1]
    a_pad = w2p.shape[1]
    tm = _pick_tm(B)

    return pl.pallas_call(
        pgn_kernel,
        out_shape=jax.ShapeDtypeStruct((B, a_pad), jnp.float32),
        grid=(pl.cdiv(B, tm),),
        in_specs=[
            pl.BlockSpec((tm, in_dim), lambda i: (i, 0)),       # x: tiled per step
            pl.BlockSpec((in_dim, hidden), lambda i: (0, 0)),   # w1: resident in VMEM
            pl.BlockSpec((1, hidden), lambda i: (0, 0)),        # b1: resident
            pl.BlockSpec((hidden, a_pad), lambda i: (0, 0)),    # w2 (pre-padded): resident
            pl.BlockSpec((1, a_pad), lambda i: (0, 0)),         # b2 (pre-padded): resident
        ],
        out_specs=pl.BlockSpec((tm, a_pad), lambda i: (i, 0)),
        compiler_params=pltpu.CompilerParams(
            dimension_semantics=("parallel",),  # batch tiles across TCs (v7x)
        ),
    )(x, w1, b1, w2p, b2p)


def pgn_forward(x, w1, b1, w2p, b2p, n_actions):
    """API-parity wrapper matching the torch module: returns (B, n_actions).

    Prefer pgn_forward_padded in hot loops so downstream ops (softmax/sampling)
    consume the lane-dense padded slab without an extra slice copy.
    """
    return pgn_forward_padded(x, w1, b1, w2p, b2p)[:, :n_actions]


def init_params(key, input_size, hidden, n_actions):
    # Deterministic synthetic init (roughly matching torch.nn.Linear's
    # uniform(-1/sqrt(fan_in), 1/sqrt(fan_in)) scale). Weights stored (in, out)
    # so the kernel computes x @ W directly on the MXU.
    k1, k2, k3, k4 = jax.random.split(key, 4)
    s1 = 1.0 / jnp.sqrt(input_size)
    s2 = 1.0 / jnp.sqrt(hidden)
    w1 = jax.random.uniform(k1, (input_size, hidden), jnp.float32, -s1, s1)
    b1 = jax.random.uniform(k2, (1, hidden), jnp.float32, -s1, s1)
    w2 = jax.random.uniform(k3, (hidden, n_actions), jnp.float32, -s2, s2)
    b2 = jax.random.uniform(k4, (1, n_actions), jnp.float32, -s2, s2)
    return w1, b1, w2, b2


if __name__ == "__main__":
    # LunarLander-v2: observation dim 8, 4 discrete actions; hidden 512 fixed
    # by the module. B=200 rollout chunk -> single grid step (tm=200).
    B, INPUT_SIZE, HIDDEN, N_ACTIONS = 200, 8, 512, 4

    key = jax.random.PRNGKey(0)
    kx, kp = jax.random.split(key)
    x = jax.random.normal(kx, (B, INPUT_SIZE), jnp.float32)
    w1, b1, w2, b2 = init_params(kp, INPUT_SIZE, HIDDEN, N_ACTIONS)
    ref = jnp.maximum(x @ w1 + b1, 0.0) @ w2 + b2   # pure-JAX reference

    fwd = jax.jit(pgn_forward_padded)

    # --- f32 path, single grid step (B=200 -> tm=200) -----------------------
    p32 = prepare_params(w1, b1, w2, b2, matmul_dtype=jnp.float32)
    out = jax.block_until_ready(fwd(x, *p32))
    assert out.shape == (B, LANE)
    assert jnp.allclose(out[:, :N_ACTIONS], ref, atol=1e-4, rtol=1e-4)

    # --- f32 path, multi-step grid with a ragged last block (B=600, tm=256) --
    B2 = 600
    x2 = jax.random.normal(jax.random.PRNGKey(1), (B2, INPUT_SIZE), jnp.float32)
    ref2 = jnp.maximum(x2 @ w1 + b1, 0.0) @ w2 + b2
    out2 = jax.block_until_ready(fwd(x2, *p32))
    assert out2.shape == (B2, LANE)
    assert jnp.allclose(out2[:, :N_ACTIONS], ref2, atol=1e-4, rtol=1e-4)

    # --- bf16 matmul operands (f32 accumulate / bias / ReLU), looser tol -----
    pbf = prepare_params(w1, b1, w2, b2, matmul_dtype=jnp.bfloat16)
    out_bf = jax.block_until_ready(fwd(x, *pbf))
    assert jnp.allclose(out_bf[:, :N_ACTIONS], ref, atol=5e-2, rtol=5e-2)

    # API-parity wrapper (returns (B, n_actions) like the torch module).
    sliced = jax.block_until_ready(
        jax.jit(pgn_forward, static_argnums=(5,))(x, *p32, N_ACTIONS))
    assert sliced.shape == (B, N_ACTIONS)

    print("KERNEL_OK")
</pallas_src>

<mosaic_0001>
module attributes {stable_mosaic.version = 11 : i64} {
  func.func @pgn_kernel(%arg0: i32, %arg1: memref<200x8xf32, #tpu.memory_space<vmem>>, %arg2: memref<8x512xf32, #tpu.memory_space<vmem>>, %arg3: memref<1x512xf32, #tpu.memory_space<vmem>>, %arg4: memref<512x128xf32, #tpu.memory_space<vmem>>, %arg5: memref<1x128xf32, #tpu.memory_space<vmem>>, %arg6: memref<200x128xf32, #tpu.memory_space<vmem>>) attributes {dimension_semantics = [#tpu.dimension_semantics<parallel>], iteration_bounds = array<i64: 1>, scalar_prefetch = 0 : i64, scratch_operands = 0 : i64, tpu.core_type = #tpu.core_type<tc>, window_params = [{transform_indices = @transform_0, window_bounds = array<i64: 200, 8>}, {pipeline_mode = #tpu.pipeline_mode<synchronous>, transform_indices = @transform_1, window_bounds = array<i64: 8, 512>}, {pipeline_mode = #tpu.pipeline_mode<synchronous>, transform_indices = @transform_2, window_bounds = array<i64: 1, 512>}, {pipeline_mode = #tpu.pipeline_mode<synchronous>, transform_indices = @transform_3, window_bounds = array<i64: 512, 128>}, {pipeline_mode = #tpu.pipeline_mode<synchronous>, transform_indices = @transform_4, window_bounds = array<i64: 1, 128>}, {transform_indices = @transform_5, window_bounds = array<i64: 200, 128>}]} {
    %c0 = arith.constant 0 : index
    %c0_0 = arith.constant 0 : index
    %0 = vector.load %arg1[%c0, %c0_0] : memref<200x8xf32, #tpu.memory_space<vmem>>, vector<200x8xf32>
    %c0_1 = arith.constant 0 : index
    %c0_2 = arith.constant 0 : index
    %1 = vector.load %arg2[%c0_1, %c0_2] : memref<8x512xf32, #tpu.memory_space<vmem>>, vector<8x512xf32>
    %cst = arith.constant dense<0.000000e+00> : vector<200x512xf32>
    %2 = tpu.matmul %0, %1, %cst {dimension_numbers = #tpu.dot_dimension_numbers<[1], [0], [0], [1], [0, 0, 1, 1], [], []>} : vector<200x8xf32>, vector<8x512xf32>, vector<200x512xf32> -> vector<200x512xf32>
    %c0_3 = arith.constant 0 : index
    %c0_4 = arith.constant 0 : index
    %3 = vector.load %arg3[%c0_3, %c0_4] : memref<1x512xf32, #tpu.memory_space<vmem>>, vector<1x512xf32>
    %4 = vector.broadcast %3 : vector<1x512xf32> to vector<200x512xf32>
    %5 = arith.addf %2, %4 : vector<200x512xf32>
    %cst_5 = arith.constant 0.000000e+00 : f32
    %6 = vector.broadcast %cst_5 : f32 to vector<200x512xf32>
    %7 = arith.maximumf %5, %6 : vector<200x512xf32>
    %c0_6 = arith.constant 0 : index
    %c0_7 = arith.constant 0 : index
    %8 = vector.load %arg4[%c0_6, %c0_7] : memref<512x128xf32, #tpu.memory_space<vmem>>, vector<512x128xf32>
    %cst_8 = arith.constant dense<0.000000e+00> : vector<200x128xf32>
    %9 = tpu.matmul %7, %8, %cst_8 {dimension_numbers = #tpu.dot_dimension_numbers<[1], [0], [0], [1], [0, 0, 1, 1], [], []>} : vector<200x512xf32>, vector<512x128xf32>, vector<200x128xf32> -> vector<200x128xf32>
    %c0_9 = arith.constant 0 : index
    %c0_10 = arith.constant 0 : index
    %10 = vector.load %arg5[%c0_9, %c0_10] : memref<1x128xf32, #tpu.memory_space<vmem>>, vector<1x128xf32>
    %11 = vector.broadcast %10 : vector<1x128xf32> to vector<200x128xf32>
    %12 = arith.addf %9, %11 : vector<200x128xf32>
    %c0_11 = arith.constant 0 : index
    %c0_12 = arith.constant 0 : index
    %13 = vector.load %arg6[%c0_11, %c0_12] : memref<200x128xf32, #tpu.memory_space<vmem>>, vector<200x128xf32>
    tpu.vector_store %arg6[%c0_11, %c0_12], %12 {strides = array<i32>} : memref<200x128xf32, #tpu.memory_space<vmem>>, vector<200x128xf32>,
    return
  }
  func.func @transform_0(%arg0: i32) -> (i32, i32) {
    %c0_i32 = arith.constant 0 : i32
    %c0_i32_0 = arith.constant 0 : i32
    return %arg0, %c0_i32 : i32, i32
  }
  func.func @transform_1(%arg0: i32) -> (i32, i32) {
    %c0_i32 = arith.constant 0 : i32
    %c0_i32_0 = arith.constant 0 : i32
    %c0_i32_1 = arith.constant 0 : i32
    return %c0_i32, %c0_i32_0 : i32, i32
  }
  func.func @transform_2(%arg0: i32) -> (i32, i32) {
    %c0_i32 = arith.constant 0 : i32
    %c0_i32_0 = arith.constant 0 : i32
    %c0_i32_1 = arith.constant 0 : i32
    return %c0_i32, %c0_i32_0 : i32, i32
  }
  func.func @transform_3(%arg0: i32) -> (i32, i32) {
    %c0_i32 = arith.constant 0 : i32
    %c0_i32_0 = arith.constant 0 : i32
    %c0_i32_1 = arith.constant 0 : i32
    return %c0_i32, %c0_i32_0 : i32, i32
  }
  func.func @transform_4(%arg0: i32) -> (i32, i32) {
    %c0_i32 = arith.constant 0 : i32
    %c0_i32_0 = arith.constant 0 : i32
    %c0_i32_1 = arith.constant 0 : i32
    return %c0_i32, %c0_i32_0 : i32, i32
  }
  func.func @transform_5(%arg0: i32) -> (i32, i32) {
    %c0_i32 = arith.constant 0 : i32
    %c0_i32_0 = arith.constant 0 : i32
    return %arg0, %c0_i32 : i32, i32
  }
}

</mosaic_0001>

<llo_original>
// kernel: pgn_forward_padded.1
$region0: #{pgn_forward_padded.1}
  #allocation0 [shape = 'u32[]', space=smem, size = 0x4, offset = 0x4, fixed_abs, tag = 'smem constant byte address 0x4 - core index']
  #allocation1 [shape = 'u32[72,128]{1,0:T(1,128)}', space=vmem, size = 0x9000, scoped, tag = 'internal scratch']
  %s0 = inlined_call_operand.vmem [shape: f32[200,8], index: 0, kind: input, shape index: {}]
  %s1 = inlined_call_operand.vmem [shape: f32[8,512], index: 1, kind: input, shape index: {}]
  %s2 = inlined_call_operand.vmem [shape: f32[1,512], index: 2, kind: input, shape index: {}]
  %s3 = inlined_call_operand.hbm [shape: f32[512,128], index: 3, kind: input, shape index: {}]
  %s4 = inlined_call_operand.vmem [shape: f32[1,128], index: 4, kind: input, shape index: {}]
  %s5 = inlined_call_operand.hbm [shape: f32[200,128], index: 5, kind: output, shape index: {}]
  %s6 = sld [smem:[#allocation0]]
  $region34: #{pgn_forward_padded.1} parent=0
    _
  %s8 = ssub.s32 1, %s6
  %s9 = scalar_select 0, %s8, %s6
  $region1: #{pgn_forward_padded.1} parent=0
    #allocation2 [shape = 'u8[262144]{0}', space=vmem, size = 0x40000, scoped, tag = 'input window, operand 3, single buffered']
    #allocation3 [shape = 's32[1]{0}', space=sflag, size = 0x4, scoped, tag = 'scoped memory for pgn_forward_padded.1']
    #allocation4 [shape = 's32[1]{0}', space=sflag, size = 0x4, scoped, tag = 'scoped memory for pgn_forward_padded.1']
    #allocation5 [shape = 'u8[102400]{0}', space=vmem, size = 0x19000, scoped, tag = 'output window, operand 0, single buffered']
    %10 = vsyncpa [#allocation3], 0
    %11 = vsyncpa [#allocation4], 0
    // Predicated region
    $region2: #{pgn_forward_padded.1} parent=1 // pred_check
      _
    $region3: #{pgn_forward_padded.1} parent=1 // pred_check_branch
      %13 = sbr.rel (0) target = $region5
    $region4: #{pgn_forward_padded.1} parent=1 // pred_region
      _
    $region5: #{pgn_forward_padded.1} parent=1 // pred_fallthru
      _
    // Predicated region
    $region6: #{pgn_forward_padded.1} parent=1 // pred_check
      _
    $region7: #{pgn_forward_padded.1} parent=1 // pred_check_branch
      %15 = sbr.rel (0) target = $region9
    $region8: #{pgn_forward_padded.1} parent=1 // pred_region
      _
    $region9: #{pgn_forward_padded.1} parent=1 // pred_fallthru
      _
    // Predicated region
    $region10: #{pgn_forward_padded.1} parent=1 // pred_check
      _
    $region11: #{pgn_forward_padded.1} parent=1 // pred_check_branch
      %17 = sbr.rel (0) target = $region13
    $region12: #{pgn_forward_padded.1} parent=1 // pred_region
      _
    $region13: #{pgn_forward_padded.1} parent=1 // pred_fallthru
      _
    // Predicated region
    $region14: #{pgn_forward_padded.1} parent=1 // pred_check
      _
    $region15: #{pgn_forward_padded.1} parent=1 // pred_check_branch
      %19 = sbr.rel (0) target = $region17
    $region16: #{pgn_forward_padded.1} parent=1 // pred_region
      %21 = vsyncadd [#allocation3], 0
      %s22 = sshll.u32 %s3, 4
      %s23 = int_to_ptr.hbm [resolvable:$true] %s22
      %s24 = sshll.u32 [#allocation2], 4
      %s25 = int_to_ptr.vmem [resolvable:$true] %s24
      %30 = dma.hbm_to_vmem [thread:$0]  %s23, 8192, %s25, [#allocation3], 128, 128, 8
    $region17: #{pgn_forward_padded.1} parent=1 // pred_fallthru
      _
    // Predicated region
    $region18: #{pgn_forward_padded.1} parent=1 // pred_check
      _
    $region19: #{pgn_forward_padded.1} parent=1 // pred_check_branch
      %32 = sbr.rel (0) target = $region21
    $region20: #{pgn_forward_padded.1} parent=1 // pred_region
      _
    $region21: #{pgn_forward_padded.1} parent=1 // pred_fallthru
      _
    // Predicated region
    $region22: #{pgn_forward_padded.1} parent=1 // pred_check
      _
    $region23: #{pgn_forward_padded.1} parent=1 // pred_check_branch
      %34 = sbr.rel (0) target = $region25
    $region24: #{pgn_forward_padded.1} parent=1 // pred_region
      %36 = dma.done [#allocation3], 8192
    $region25: #{pgn_forward_padded.1} parent=1 // pred_fallthru
      _
    %v37 = vld [vmem:[%s0] sm:$0xff]
    %v38 = vld [vmem:[%s0 + $0x8] sm:$0xff]
    %v39 = vld [vmem:[%s0 + $0x10] sm:$0xff]
    %v40 = vld [vmem:[%s0 + $0x18] sm:$0xff]
    %v41 = vld [vmem:[%s0 + $0x20] sm:$0xff]
    %v42 = vld [vmem:[%s0 + $0x28] sm:$0xff]
    %v43 = vld [vmem:[%s0 + $0x30] sm:$0xff]
    %v44 = vld [vmem:[%s0 + $0x38] sm:$0xff]
    %v45 = vld [vmem:[%s0 + $0x40] sm:$0xff]
    %v46 = vld [vmem:[%s0 + $0x48] sm:$0xff]
    %v47 = vld [vmem:[%s0 + $0x50] sm:$0xff]
    %v48 = vld [vmem:[%s0 + $0x58] sm:$0xff]
    %v49 = vld [vmem:[%s0 + $0x60] sm:$0xff]
    %v50 = vld [vmem:[%s0 + $0x68] sm:$0xff]
    %v51 = vld [vmem:[%s0 + $0x70] sm:$0xff]
    %v52 = vld [vmem:[%s0 + $0x78] sm:$0xff]
    %v53 = vld [vmem:[%s0 + $0x80] sm:$0xff]
    %v54 = vld [vmem:[%s0 + $0x88] sm:$0xff]
    %v55 = vld [vmem:[%s0 + $0x90] sm:$0xff]
    %v56 = vld [vmem:[%s0 + $0x98] sm:$0xff]
    %v57 = vld [vmem:[%s0 + $0xa0] sm:$0xff]
    %v58 = vld [vmem:[%s0 + $0xa8] sm:$0xff]
    %v59 = vld [vmem:[%s0 + $0xb0] sm:$0xff]
    %v60 = vld [vmem:[%s0 + $0xb8] sm:$0xff]
    %v61 = vld [vmem:[%s0 + $0xc0] sm:$0xff]
    %v62 = vld [vmem:[%s1] sm:$0xff]
    %v63 = vld [vmem:[%s1 + $0x8] sm:$0xff]
    %v64 = vld [vmem:[%s1 + $0x10] sm:$0xff]
    %v65 = vld [vmem:[%s1 + $0x18] sm:$0xff]
    %v66 = vld [vmem:[%s2] sm:$0xf]
    %v68 = vperm.slane %v66, 0
    %v69 = vperm.slane %v66, 1
    %v70 = vperm.slane %v66, 2
    %v71 = vperm.slane %v66, 3
    %vm76 = vcmask 64512
    %v78 = vsel %vm76, %v37, 0
    %v81 = vsel %vm76, %v38, 0
    %v84 = vsel %vm76, %v39, 0
    %v87 = vsel %vm76, %v40, 0
    %v90 = vsel %vm76, %v41, 0
    %v93 = vsel %vm76, %v42, 0
    %v96 = vsel %vm76, %v43, 0
    %v99 = vsel %vm76, %v44, 0
    %v102 = vsel %vm76, %v45, 0
    %v105 = vsel %vm76, %v46, 0
    %v108 = vsel %vm76, %v47, 0
    %v111 = vsel %vm76, %v48, 0
    %v114 = vsel %vm76, %v49, 0
    %v117 = vsel %vm76, %v50, 0
    %v120 = vsel %vm76, %v51, 0
    %v123 = vsel %vm76, %v52, 0
    %v126 = vsel %vm76, %v53, 0
    %v129 = vsel %vm76, %v54, 0
    %v132 = vsel %vm76, %v55, 0
    %v135 = vsel %vm76, %v56, 0
    %v138 = vsel %vm76, %v57, 0
    %v141 = vsel %vm76, %v58, 0
    %v144 = vsel %vm76, %v59, 0
    %v147 = vsel %vm76, %v60, 0
    %v150 = vsel %vm76, %v61, 0
    %152 = vmatpush.msra.mxu0 0.0
    %153 = vmatpush.msra.mxu0 0.0
    %154 = vmatpush.msra.mxu0 0.0
    %155 = vmatpush.msra.mxu0 0.0
    %156 = vmatpush.msra.mxu0 0.0
    %157 = vmatpush.msra.mxu0 0.0
    %158 = vmatpush.msra.mxu0 0.0
    %159 = vmatpush.msra.mxu0 0.0
    %160 = vmatpush.msra.mxu0 0.0
    %161 = vmatpush.msra.mxu0 0.0
    %162 = vmatpush.msra.mxu0 0.0
    %163 = vmatpush.msra.mxu0 0.0
    %164 = vmatpush.msra.mxu0 0.0
    %165 = vmatpush.msra.mxu0 0.0
    %166 = vmatpush.msra.mxu0 0.0
    %167 = vmatpush.msra.mxu0 %v62
    %168 = vmatmul.f32.gmra.mxu0 %v78
    %v169 = vpop.f32.mrf.mxu0
    %v170 = vadd.f32 %v68, %v169
    %171 = vmatmul.f32.gmra.mxu0 %v81
    %v172 = vpop.f32.mrf.mxu0
    %v173 = vadd.f32 %v68, %v172
    %174 = vmatmul.f32.gmra.mxu0 %v84
    %v175 = vpop.f32.mrf.mxu0
    %v176 = vadd.f32 %v68, %v175
    %177 = vmatmul.f32.gmra.mxu0 %v87
    %v178 = vpop.f32.mrf.mxu0
    %v179 = vadd.f32 %v68, %v178
    %180 = vmatmul.f32.gmra.mxu0 %v90
    %v181 = vpop.f32.mrf.mxu0
    %v182 = vadd.f32 %v68, %v181
    %183 = vmatmul.f32.gmra.mxu0 %v93
    %v184 = vpop.f32.mrf.mxu0
    %v185 = vadd.f32 %v68, %v184
    %186 = vmatmul.f32.gmra.mxu0 %v96
    %v187 = vpop.f32.mrf.mxu0
    %v188 = vadd.f32 %v68, %v187
    %189 = vmatmul.f32.gmra.mxu0 %v99
    %v190 = vpop.f32.mrf.mxu0
    %v191 = vadd.f32 %v68, %v190
    %192 = vmatmul.f32.gmra.mxu0 %v102
    %v193 = vpop.f32.mrf.mxu0
    %v194 = vadd.f32 %v68, %v193
    %195 = vmatmul.f32.gmra.mxu0 %v105
    %v196 = vpop.f32.mrf.mxu0
    %v197 = vadd.f32 %v68, %v196
    %198 = vmatmul.f32.gmra.mxu0 %v108
    %v199 = vpop.f32.mrf.mxu0
    %v200 = vadd.f32 %v68, %v199
    %201 = vmatmul.f32.gmra.mxu0 %v111
    %v202 = vpop.f32.mrf.mxu0
    %v203 = vadd.f32 %v68, %v202
    %204 = vmatmul.f32.gmra.mxu0 %v114
    %v205 = vpop.f32.mrf.mxu0
    %v206 = vadd.f32 %v68, %v205
    %207 = vmatmul.f32.gmra.mxu0 %v117
    %v208 = vpop.f32.mrf.mxu0
    %v209 = vadd.f32 %v68, %v208
    %210 = vmatmul.f32.gmra.mxu0 %v120
    %v211 = vpop.f32.mrf.mxu0
    %v212 = vadd.f32 %v68, %v211
    %213 = vmatmul.f32.gmra.mxu0 %v123
    %v214 = vpop.f32.mrf.mxu0
    %v215 = vadd.f32 %v68, %v214
    %216 = vmatmul.f32.gmra.mxu0 %v126
    %v217 = vpop.f32.mrf.mxu0
    %v218 = vadd.f32 %v68, %v217
    %219 = vmatmul.f32.gmra.mxu0 %v129
    %v220 = vpop.f32.mrf.mxu0
    %v221 = vadd.f32 %v68, %v220
    %222 = vmatmul.f32.gmra.mxu0 %v132
    %v223 = vpop.f32.mrf.mxu0
    %v224 = vadd.f32 %v68, %v223
    %225 = vmatmul.f32.gmra.mxu0 %v135
    %v226 = vpop.f32.mrf.mxu0
    %v227 = vadd.f32 %v68, %v226
    %228 = vmatmul.f32.gmra.mxu0 %v138
    %v229 = vpop.f32.mrf.mxu0
    %v230 = vadd.f32 %v68, %v229
    %231 = vmatmul.f32.gmra.mxu0 %v141
    %v232 = vpop.f32.mrf.mxu0
    %v233 = vadd.f32 %v68, %v232
    %234 = vmatmul.f32.gmra.mxu0 %v144
    %v235 = vpop.f32.mrf.mxu0
    %v236 = vadd.f32 %v68, %v235
    %237 = vmatmul.f32.gmra.mxu0 %v147
    %v238 = vpop.f32.mrf.mxu0
    %v239 = vadd.f32 %v68, %v238
    %240 = vmatmul.f32.gmra.mxu0 %v150
    %v241 = vpop.f32.mrf.mxu0
    %v242 = vadd.f32 %v68, %v241
    %243 = vdwg.mxu0
    %244 = vmatpush.msra.mxu0 0.0
    %245 = vmatpush.msra.mxu0 0.0
    %246 = vmatpush.msra.mxu0 0.0
    %247 = vmatpush.msra.mxu0 0.0
    %248 = vmatpush.msra.mxu0 0.0
    %249 = vmatpush.msra.mxu0 0.0
    %250 = vmatpush.msra.mxu0 0.0
    %251 = vmatpush.msra.mxu0 0.0
    %252 = vmatpush.msra.mxu0 0.0
    %253 = vmatpush.msra.mxu0 0.0
    %254 = vmatpush.msra.mxu0 0.0
    %255 = vmatpush.msra.mxu0 0.0
    %256 = vmatpush.msra.mxu0 0.0
    %257 = vmatpush.msra.mxu0 0.0
    %258 = vmatpush.msra.mxu0 0.0
    %259 = vmatpush.msra.mxu0 %v63
    %260 = vmatmul.f32.gmra.mxu0 %v78
    %v261 = vpop.f32.mrf.mxu0
    %v262 = vadd.f32 %v69, %v261
    %263 = vmatmul.f32.gmra.mxu0 %v81
    %v264 = vpop.f32.mrf.mxu0
    %v265 = vadd.f32 %v69, %v264
    %266 = vmatmul.f32.gmra.mxu0 %v84
    %v267 = vpop.f32.mrf.mxu0
    %v268 = vadd.f32 %v69, %v267
    %269 = vmatmul.f32.gmra.mxu0 %v87
    %v270 = vpop.f32.mrf.mxu0
    %v271 = vadd.f32 %v69, %v270
    %272 = vmatmul.f32.gmra.mxu0 %v90
    %v273 = vpop.f32.mrf.mxu0
    %v274 = vadd.f32 %v69, %v273
    %275 = vmatmul.f32.gmra.mxu0 %v93
    %v276 = vpop.f32.mrf.mxu0
    %v277 = vadd.f32 %v69, %v276
    %278 = vmatmul.f32.gmra.mxu0 %v96
    %v279 = vpop.f32.mrf.mxu0
    %v280 = vadd.f32 %v69, %v279
    %281 = vmatmul.f32.gmra.mxu0 %v99
    %v282 = vpop.f32.mrf.mxu0
    %v283 = vadd.f32 %v69, %v282
    %284 = vmatmul.f32.gmra.mxu0 %v102
    %v285 = vpop.f32.mrf.mxu0
    %v286 = vadd.f32 %v69, %v285
    %287 = vmatmul.f32.gmra.mxu0 %v105
    %v288 = vpop.f32.mrf.mxu0
    %v289 = vadd.f32 %v69, %v288
    %290 = vmatmul.f32.gmra.mxu0 %v108
    %v291 = vpop.f32.mrf.mxu0
    %v292 = vadd.f32 %v69, %v291
    %293 = vmatmul.f32.gmra.mxu0 %v111
    %v294 = vpop.f32.mrf.mxu0
    %v295 = vadd.f32 %v69, %v294
    %296 = vmatmul.f32.gmra.mxu0 %v114
    %v297 = vpop.f32.mrf.mxu0
    %v298 = vadd.f32 %v69, %v297
    %299 = vmatmul.f32.gmra.mxu0 %v117
    %v300 = vpop.f32.mrf.mxu0
    %v301 = vadd.f32 %v69, %v300
    %302 = vmatmul.f32.gmra.mxu0 %v120
    %v303 = vpop.f32.mrf.mxu0
    %v304 = vadd.f32 %v69, %v303
    %305 = vmatmul.f32.gmra.mxu0 %v123
    %v306 = vpop.f32.mrf.mxu0
    %v307 = vadd.f32 %v69, %v306
    %308 = vmatmul.f32.gmra.mxu0 %v126
    %v309 = vpop.f32.mrf.mxu0
    %v310 = vadd.f32 %v69, %v309
    %311 = vmatmul.f32.gmra.mxu0 %v129
    %v312 = vpop.f32.mrf.mxu0
    %v313 = vadd.f32 %v69, %v312
    %314 = vmatmul.f32.gmra.mxu0 %v132
    %v315 = vpop.f32.mrf.mxu0
    %v316 = vadd.f32 %v69, %v315
    %317 = vmatmul.f32.gmra.mxu0 %v135
    %v318 = vpop.f32.mrf.mxu0
    %v319 = vadd.f32 %v69, %v318
    %320 = vmatmul.f32.gmra.mxu0 %v138
    %v321 = vpop.f32.mrf.mxu0
    %v322 = vadd.f32 %v69, %v321
    %323 = vmatmul.f32.gmra.mxu0 %v141
    %v324 = vpop.f32.mrf.mxu0
    %v325 = vadd.f32 %v69, %v324
    %326 = vmatmul.f32.gmra.mxu0 %v144
    %v327 = vpop.f32.mrf.mxu0
    %v328 = vadd.f32 %v69, %v327
    %329 = vmatmul.f32.gmra.mxu0 %v147
    %v330 = vpop.f32.mrf.mxu0
    %v331 = vadd.f32 %v69, %v330
    %332 = vmatmul.f32.gmra.mxu0 %v150
    %v333 = vpop.f32.mrf.mxu0
    %v334 = vadd.f32 %v69, %v333
    %335 = vdwg.mxu0
    %336 = vmatpush.msra.mxu0 0.0
    %337 = vmatpush.msra.mxu0 0.0
    %338 = vmatpush.msra.mxu0 0.0
    %339 = vmatpush.msra.mxu0 0.0
    %340 = vmatpush.msra.mxu0 0.0
    %341 = vmatpush.msra.mxu0 0.0
    %342 = vmatpush.msra.mxu0 0.0
    %343 = vmatpush.msra.mxu0 0.0
    %344 = vmatpush.msra.mxu0 0.0
    %345 = vmatpush.msra.mxu0 0.0
    %346 = vmatpush.msra.mxu0 0.0
    %347 = vmatpush.msra.mxu0 0.0
    %348 = vmatpush.msra.mxu0 0.0
    %349 = vmatpush.msra.mxu0 0.0
    %350 = vmatpush.msra.mxu0 0.0
    %351 = vmatpush.msra.mxu0 %v64
    %352 = vmatmul.f32.gmra.mxu0 %v78
    %v353 = vpop.f32.mrf.mxu0
    %v354 = vadd.f32 %v70, %v353
    %355 = vmatmul.f32.gmra.mxu0 %v81
    %v356 = vpop.f32.mrf.mxu0
    %v357 = vadd.f32 %v70, %v356
    %358 = vmatmul.f32.gmra.mxu0 %v84
    %v359 = vpop.f32.mrf.mxu0
    %v360 = vadd.f32 %v70, %v359
    %361 = vmatmul.f32.gmra.mxu0 %v87
    %v362 = vpop.f32.mrf.mxu0
    %v363 = vadd.f32 %v70, %v362
    %364 = vmatmul.f32.gmra.mxu0 %v90
    %v365 = vpop.f32.mrf.mxu0
    %v366 = vadd.f32 %v70, %v365
    %367 = vmatmul.f32.gmra.mxu0 %v93
    %v368 = vpop.f32.mrf.mxu0
    %v369 = vadd.f32 %v70, %v368
    %370 = vmatmul.f32.gmra.mxu0 %v96
    %v371 = vpop.f32.mrf.mxu0
    %v372 = vadd.f32 %v70, %v371
    %373 = vmatmul.f32.gmra.mxu0 %v99
    %v374 = vpop.f32.mrf.mxu0
    %v375 = vadd.f32 %v70, %v374
    %376 = vmatmul.f32.gmra.mxu0 %v102
    %v377 = vpop.f32.mrf.mxu0
    %v378 = vadd.f32 %v70, %v377
    %379 = vmatmul.f32.gmra.mxu0 %v105
    %v380 = vpop.f32.mrf.mxu0
    %v381 = vadd.f32 %v70, %v380
    %382 = vmatmul.f32.gmra.mxu0 %v108
    %v383 = vpop.f32.mrf.mxu0
    %v384 = vadd.f32 %v70, %v383
    %385 = vmatmul.f32.gmra.mxu0 %v111
    %v386 = vpop.f32.mrf.mxu0
    %v387 = vadd.f32 %v70, %v386
    %388 = vmatmul.f32.gmra.mxu0 %v114
    %v389 = vpop.f32.mrf.mxu0
    %v390 = vadd.f32 %v70, %v389
    %391 = vmatmul.f32.gmra.mxu0 %v117
    %v392 = vpop.f32.mrf.mxu0
    %v393 = vadd.f32 %v70, %v392
    %394 = vmatmul.f32.gmra.mxu0 %v120
    %v395 = vpop.f32.mrf.mxu0
    %v396 = vadd.f32 %v70, %v395
    %397 = vmatmul.f32.gmra.mxu0 %v123
    %v398 = vpop.f32.mrf.mxu0
    %v399 = vadd.f32 %v70, %v398
    %400 = vmatmul.f32.gmra.mxu0 %v126
    %v401 = vpop.f32.mrf.mxu0
    %v402 = vadd.f32 %v70, %v401
    %403 = vmatmul.f32.gmra.mxu0 %v129
    %v404 = vpop.f32.mrf.mxu0
    %v405 = vadd.f32 %v70, %v404
    %406 = vmatmul.f32.gmra.mxu0 %v132
    %v407 = vpop.f32.mrf.mxu0
    %v408 = vadd.f32 %v70, %v407
    %409 = vmatmul.f32.gmra.mxu0 %v135
    %v410 = vpop.f32.mrf.mxu0
    %v411 = vadd.f32 %v70, %v410
    %412 = vmatmul.f32.gmra.mxu0 %v138
    %v413 = vpop.f32.mrf.mxu0
    %v414 = vadd.f32 %v70, %v413
    %415 = vmatmul.f32.gmra.mxu0 %v141
    %v416 = vpop.f32.mrf.mxu0
    %v417 = vadd.f32 %v70, %v416
    %418 = vmatmul.f32.gmra.mxu0 %v144
    %v419 = vpop.f32.mrf.mxu0
    %v420 = vadd.f32 %v70, %v419
    %421 = vmatmul.f32.gmra.mxu0 %v147
    %v422 = vpop.f32.mrf.mxu0
    %v423 = vadd.f32 %v70, %v422
    %424 = vmatmul.f32.gmra.mxu0 %v150
    %v425 = vpop.f32.mrf.mxu0
    %v426 = vadd.f32 %v70, %v425
    %427 = vdwg.mxu0
    %428 = vmatpush.msra.mxu0 0.0
    %429 = vmatpush.msra.mxu0 0.0
    %430 = vmatpush.msra.mxu0 0.0
    %431 = vmatpush.msra.mxu0 0.0
    %432 = vmatpush.msra.mxu0 0.0
    %433 = vmatpush.msra.mxu0 0.0
    %434 = vmatpush.msra.mxu0 0.0
    %435 = vmatpush.msra.mxu0 0.0
    %436 = vmatpush.msra.mxu0 0.0
    %437 = vmatpush.msra.mxu0 0.0
    %438 = vmatpush.msra.mxu0 0.0
    %439 = vmatpush.msra.mxu0 0.0
    %440 = vmatpush.msra.mxu0 0.0
    %441 = vmatpush.msra.mxu0 0.0
    %442 = vmatpush.msra.mxu0 0.0
    %443 = vmatpush.msra.mxu0 %v65
    %444 = vmatmul.f32.gmra.mxu0 %v78
    %v445 = vpop.f32.mrf.mxu0
    %v446 = vadd.f32 %v71, %v445
    %447 = vmatmul.f32.gmra.mxu0 %v81
    %v448 = vpop.f32.mrf.mxu0
    %v449 = vadd.f32 %v71, %v448
    %450 = vmatmul.f32.gmra.mxu0 %v84
    %v451 = vpop.f32.mrf.mxu0
    %v452 = vadd.f32 %v71, %v451
    %453 = vmatmul.f32.gmra.mxu0 %v87
    %v454 = vpop.f32.mrf.mxu0
    %v455 = vadd.f32 %v71, %v454
    %456 = vmatmul.f32.gmra.mxu0 %v90
    %v457 = vpop.f32.mrf.mxu0
    %v458 = vadd.f32 %v71, %v457
    %459 = vmatmul.f32.gmra.mxu0 %v93
    %v460 = vpop.f32.mrf.mxu0
    %v461 = vadd.f32 %v71, %v460
    %462 = vmatmul.f32.gmra.mxu0 %v96
    %v463 = vpop.f32.mrf.mxu0
    %v464 = vadd.f32 %v71, %v463
    %465 = vmatmul.f32.gmra.mxu0 %v99
    %v466 = vpop.f32.mrf.mxu0
    %v467 = vadd.f32 %v71, %v466
    %468 = vmatmul.f32.gmra.mxu0 %v102
    %v469 = vpop.f32.mrf.mxu0
    %v470 = vadd.f32 %v71, %v469
    %471 = vmatmul.f32.gmra.mxu0 %v105
    %v472 = vpop.f32.mrf.mxu0
    %v473 = vadd.f32 %v71, %v472
    %474 = vmatmul.f32.gmra.mxu0 %v108
    %v475 = vpop.f32.mrf.mxu0
    %v476 = vadd.f32 %v71, %v475
    %477 = vmatmul.f32.gmra.mxu0 %v111
    %v478 = vpop.f32.mrf.mxu0
    %v479 = vadd.f32 %v71, %v478
    %480 = vmatmul.f32.gmra.mxu0 %v114
    %v481 = vpop.f32.mrf.mxu0
    %v482 = vadd.f32 %v71, %v481
    %483 = vmatmul.f32.gmra.mxu0 %v117
    %v484 = vpop.f32.mrf.mxu0
    %v485 = vadd.f32 %v71, %v484
    %486 = vmatmul.f32.gmra.mxu0 %v120
    %v487 = vpop.f32.mrf.mxu0
    %v488 = vadd.f32 %v71, %v487
    %489 = vmatmul.f32.gmra.mxu0 %v123
    %v490 = vpop.f32.mrf.mxu0
    %v491 = vadd.f32 %v71, %v490
    %492 = vmatmul.f32.gmra.mxu0 %v126
    %v493 = vpop.f32.mrf.mxu0
    %v494 = vadd.f32 %v71, %v493
    %495 = vmatmul.f32.gmra.mxu0 %v129
    %v496 = vpop.f32.mrf.mxu0
    %v497 = vadd.f32 %v71, %v496
    %498 = vmatmul.f32.gmra.mxu0 %v132
    %v499 = vpop.f32.mrf.mxu0
    %v500 = vadd.f32 %v71, %v499
    %501 = vmatmul.f32.gmra.mxu0 %v135
    %v502 = vpop.f32.mrf.mxu0
    %v503 = vadd.f32 %v71, %v502
    %504 = vmatmul.f32.gmra.mxu0 %v138
    %v505 = vpop.f32.mrf.mxu0
    %v506 = vadd.f32 %v71, %v505
    %507 = vmatmul.f32.gmra.mxu0 %v141
    %v508 = vpop.f32.mrf.mxu0
    %v509 = vadd.f32 %v71, %v508
    %510 = vmatmul.f32.gmra.mxu0 %v144
    %v511 = vpop.f32.mrf.mxu0
    %v512 = vadd.f32 %v71, %v511
    %513 = vmatmul.f32.gmra.mxu0 %v147
    %v514 = vpop.f32.mrf.mxu0
    %v515 = vadd.f32 %v71, %v514
    %516 = vmatmul.f32.gmra.mxu0 %v150
    %v517 = vpop.f32.mrf.mxu0
    %v518 = vadd.f32 %v71, %v517
    %519 = vdwg.mxu0
    %v520 = vmax.f32 %v170, 0.0
    %v521 = vmax.f32 %v262, 0.0
    %v522 = vmax.f32 %v354, 0.0
    %v523 = vmax.f32 %v446, 0.0
    %v524 = vmax.f32 %v173, 0.0
    %v525 = vmax.f32 %v265, 0.0
    %v526 = vmax.f32 %v357, 0.0
    %v527 = vmax.f32 %v449, 0.0
    %v528 = vmax.f32 %v176, 0.0
    %v529 = vmax.f32 %v268, 0.0
    %v530 = vmax.f32 %v360, 0.0
    %v531 = vmax.f32 %v452, 0.0
    %v532 = vmax.f32 %v179, 0.0
    %v533 = vmax.f32 %v271, 0.0
    %v534 = vmax.f32 %v363, 0.0
    %v535 = vmax.f32 %v455, 0.0
    %v536 = vmax.f32 %v182, 0.0
    %v537 = vmax.f32 %v274, 0.0
    %v538 = vmax.f32 %v366, 0.0
    %v539 = vmax.f32 %v458, 0.0
    %v540 = vmax.f32 %v185, 0.0
    %v541 = vmax.f32 %v277, 0.0
    %v542 = vmax.f32 %v369, 0.0
    %v543 = vmax.f32 %v461, 0.0
    %v544 = vmax.f32 %v188, 0.0
    %v545 = vmax.f32 %v280, 0.0
    %v546 = vmax.f32 %v372, 0.0
    %v547 = vmax.f32 %v464, 0.0
    %v548 = vmax.f32 %v191, 0.0
    %v549 = vmax.f32 %v283, 0.0
    %v550 = vmax.f32 %v375, 0.0
    %v551 = vmax.f32 %v467, 0.0
    %v552 = vmax.f32 %v194, 0.0
    %v553 = vmax.f32 %v286, 0.0
    %v554 = vmax.f32 %v378, 0.0
    %v555 = vmax.f32 %v470, 0.0
    %v556 = vmax.f32 %v197, 0.0
    %v557 = vmax.f32 %v289, 0.0
    %v558 = vmax.f32 %v381, 0.0
    %v559 = vmax.f32 %v473, 0.0
    %v560 = vmax.f32 %v200, 0.0
    %v561 = vmax.f32 %v292, 0.0
    %v562 = vmax.f32 %v384, 0.0
    %v563 = vmax.f32 %v476, 0.0
    %v564 = vmax.f32 %v203, 0.0
    %v565 = vmax.f32 %v295, 0.0
    %v566 = vmax.f32 %v387, 0.0
    %v567 = vmax.f32 %v479, 0.0
    %v568 = vmax.f32 %v206, 0.0
    %v569 = vmax.f32 %v298, 0.0
    %v570 = vmax.f32 %v390, 0.0
    %v571 = vmax.f32 %v482, 0.0
    %v572 = vmax.f32 %v209, 0.0
    %v573 = vmax.f32 %v301, 0.0
    %v574 = vmax.f32 %v393, 0.0
    %v575 = vmax.f32 %v485, 0.0
    %v576 = vmax.f32 %v212, 0.0
    %v577 = vmax.f32 %v304, 0.0
    %v578 = vmax.f32 %v396, 0.0
    %v579 = vmax.f32 %v488, 0.0
    %v580 = vmax.f32 %v215, 0.0
    %v581 = vmax.f32 %v307, 0.0
    %v582 = vmax.f32 %v399, 0.0
    %v583 = vmax.f32 %v491, 0.0
    %v584 = vmax.f32 %v218, 0.0
    %v585 = vmax.f32 %v310, 0.0
    %v586 = vmax.f32 %v402, 0.0
    %v587 = vmax.f32 %v494, 0.0
    %v588 = vmax.f32 %v221, 0.0
    %v589 = vmax.f32 %v313, 0.0
    %v590 = vmax.f32 %v405, 0.0
    %v591 = vmax.f32 %v497, 0.0
    %v592 = vmax.f32 %v224, 0.0
    %v593 = vmax.f32 %v316, 0.0
    %v594 = vmax.f32 %v408, 0.0
    %v595 = vmax.f32 %v500, 0.0
    %v596 = vmax.f32 %v227, 0.0
    %v597 = vmax.f32 %v319, 0.0
    %v598 = vmax.f32 %v411, 0.0
    %v599 = vmax.f32 %v503, 0.0
    %v600 = vmax.f32 %v230, 0.0
    %v601 = vmax.f32 %v322, 0.0
    %v602 = vmax.f32 %v414, 0.0
    %v603 = vmax.f32 %v506, 0.0
    %v604 = vmax.f32 %v233, 0.0
    %v605 = vmax.f32 %v325, 0.0
    %v606 = vmax.f32 %v417, 0.0
    %v607 = vmax.f32 %v509, 0.0
    %v608 = vmax.f32 %v236, 0.0
    %v609 = vmax.f32 %v328, 0.0
    %v610 = vmax.f32 %v420, 0.0
    %v611 = vmax.f32 %v512, 0.0
    %v612 = vmax.f32 %v239, 0.0
    %v613 = vmax.f32 %v331, 0.0
    %v614 = vmax.f32 %v423, 0.0
    %v615 = vmax.f32 %v515, 0.0
    %v616 = vmax.f32 %v242, 0.0
    %v617 = vmax.f32 %v334, 0.0
    %v618 = vmax.f32 %v426, 0.0
    %v619 = vmax.f32 %v518, 0.0
    %v620 = vld [vmem:[#allocation2] sm:$0xff]
    %v621 = vld [vmem:[#allocation2 + $0x8] sm:$0xff]
    %v622 = vld [vmem:[#allocation2 + $0x10] sm:$0xff]
    %v623 = vld [vmem:[#allocation2 + $0x18] sm:$0xff]
    %v624 = vld [vmem:[#allocation2 + $0x20] sm:$0xff]
    %v625 = vld [vmem:[#allocation2 + $0x28] sm:$0xff]
    %v626 = vld [vmem:[#allocation2 + $0x30] sm:$0xff]
    %v627 = vld [vmem:[#allocation2 + $0x38] sm:$0xff]
    %v628 = vld [vmem:[#allocation2 + $0x40] sm:$0xff]
    %v629 = vld [vmem:[#allocation2 + $0x48] sm:$0xff]
    %v630 = vld [vmem:[#allocation2 + $0x50] sm:$0xff]
    %v631 = vld [vmem:[#allocation2 + $0x58] sm:$0xff]
    %v632 = vld [vmem:[#allocation2 + $0x60] sm:$0xff]
    %v633 = vld [vmem:[#allocation2 + $0x68] sm:$0xff]
    %v634 = vld [vmem:[#allocation2 + $0x70] sm:$0xff]
    %v635 = vld [vmem:[#allocation2 + $0x78] sm:$0xff]
    %v636 = vld [vmem:[#allocation2 + $0x80] sm:$0xff]
    %v637 = vld [vmem:[#allocation2 + $0x88] sm:$0xff]
    %v638 = vld [vmem:[#allocation2 + $0x90] sm:$0xff]
    %v639 = vld [vmem:[#allocation2 + $0x98] sm:$0xff]
    %v640 = vld [vmem:[#allocation2 + $0xa0] sm:$0xff]
    %v641 = vld [vmem:[#allocation2 + $0xa8] sm:$0xff]
    %v642 = vld [vmem:[#allocation2 + $0xb0] sm:$0xff]
    %v643 = vld [vmem:[#allocation2 + $0xb8] sm:$0xff]
    %v644 = vld [vmem:[#allocation2 + $0xc0] sm:$0xff]
    %v645 = vld [vmem:[#allocation2 + $0xc8] sm:$0xff]
    %v646 = vld [vmem:[#allocation2 + $0xd0] sm:$0xff]
    %v647 = vld [vmem:[#allocation2 + $0xd8] sm:$0xff]
    %v648 = vld [vmem:[#allocation2 + $0xe0] sm:$0xff]
    %v649 = vld [vmem:[#allocation2 + $0xe8] sm:$0xff]
    %v650 = vld [vmem:[#allocation2 + $0xf0] sm:$0xff]
    %v651 = vld [vmem:[#allocation2 + $0xf8] sm:$0xff]
    %v652 = vld [vmem:[#allocation2 + $0x100] sm:$0xff]
    %v653 = vld [vmem:[#allocation2 + $0x108] sm:$0xff]
    %v654 = vld [vmem:[#allocation2 + $0x110] sm:$0xff]
    %v655 = vld [vmem:[#allocation2 + $0x118] sm:$0xff]
    %v656 = vld [vmem:[#allocation2 + $0x120] sm:$0xff]
    %v657 = vld [vmem:[#allocation2 + $0x128] sm:$0xff]
    %v658 = vld [vmem:[#allocation2 + $0x130] sm:$0xff]
    %v659 = vld [vmem:[#allocation2 + $0x138] sm:$0xff]
    %v660 = vld [vmem:[#allocation2 + $0x140] sm:$0xff]
    %v661 = vld [vmem:[#allocation2 + $0x148] sm:$0xff]
    %v662 = vld [vmem:[#allocation2 + $0x150] sm:$0xff]
    %v663 = vld [vmem:[#allocation2 + $0x158] sm:$0xff]
    %v664 = vld [vmem:[#allocation2 + $0x160] sm:$0xff]
    %v665 = vld [vmem:[#allocation2 + $0x168] sm:$0xff]
    %v666 = vld [vmem:[#allocation2 + $0x170] sm:$0xff]
    %v667 = vld [vmem:[#allocation2 + $0x178] sm:$0xff]
    %v668 = vld [vmem:[#allocation2 + $0x180] sm:$0xff]
    %v669 = vld [vmem:[#allocation2 + $0x188] sm:$0xff]
    %v670 = vld [vmem:[#allocation2 + $0x190] sm:$0xff]
    %v671 = vld [vmem:[#allocation2 + $0x198] sm:$0xff]
    %v672 = vld [vmem:[#allocation2 + $0x1a0] sm:$0xff]
    %v673 = vld [vmem:[#allocation2 + $0x1a8] sm:$0xff]
    %v674 = vld [vmem:[#allocation2 + $0x1b0] sm:$0xff]
    %v675 = vld [vmem:[#allocation2 + $0x1b8] sm:$0xff]
    %v676 = vld [vmem:[#allocation2 + $0x1c0] sm:$0xff]
    %v677 = vld [vmem:[#allocation2 + $0x1c8] sm:$0xff]
    %v678 = vld [vmem:[#allocation2 + $0x1d0] sm:$0xff]
    %v679 = vld [vmem:[#allocation2 + $0x1d8] sm:$0xff]
    %v680 = vld [vmem:[#allocation2 + $0x1e0] sm:$0xff]
    %v681 = vld [vmem:[#allocation2 + $0x1e8] sm:$0xff]
    %v682 = vld [vmem:[#allocation2 + $0x1f0] sm:$0xff]
    %v683 = vld [vmem:[#allocation2 + $0x1f8] sm:$0xff]
    %v684 = vld [vmem:[%s4] sm:$0x1]
    %v686 = vperm.slane %v684, 0
    %688 = vmatpush.msra.mxu0 %v635
    %689 = vmatpush.msra.mxu0 %v634
    %690 = vmatpush.msra.mxu0 %v633
    %691 = vmatpush.msra.mxu0 %v632
    %692 = vmatpush.msra.mxu0 %v631
    %693 = vmatpush.msra.mxu0 %v630
    %694 = vmatpush.msra.mxu0 %v629
    %695 = vmatpush.msra.mxu0 %v628
    %696 = vmatpush.msra.mxu0 %v627
    %697 = vmatpush.msra.mxu0 %v626
    %698 = vmatpush.msra.mxu0 %v625
    %699 = vmatpush.msra.mxu0 %v624
    %700 = vmatpush.msra.mxu0 %v623
    %701 = vmatpush.msra.mxu0 %v622
    %702 = vmatpush.msra.mxu0 %v621
    %703 = vmatpush.msra.mxu0 %v620
    %704 = vmatmul.f32.gmra.mxu0 %v520
    %v705 = vpop.f32.mrf.mxu0
    %v706 = vadd.f32 %v686, %v705
    %707 = vmatmul.f32.gmra.mxu0 %v524
    %v708 = vpop.f32.mrf.mxu0
    %v709 = vadd.f32 %v686, %v708
    %710 = vmatmul.f32.gmra.mxu0 %v528
    %v711 = vpop.f32.mrf.mxu0
    %v712 = vadd.f32 %v686, %v711
    %713 = vmatmul.f32.gmra.mxu0 %v532
    %v714 = vpop.f32.mrf.mxu0
    %v715 = vadd.f32 %v686, %v714
    %716 = vmatmul.f32.gmra.mxu0 %v536
    %v717 = vpop.f32.mrf.mxu0
    %v718 = vadd.f32 %v686, %v717
    %719 = vmatmul.f32.gmra.mxu0 %v540
    %v720 = vpop.f32.mrf.mxu0
    %v721 = vadd.f32 %v686, %v720
    %722 = vmatmul.f32.gmra.mxu0 %v544
    %v723 = vpop.f32.mrf.mxu0
    %v724 = vadd.f32 %v686, %v723
    %725 = vmatmul.f32.gmra.mxu0 %v548
    %v726 = vpop.f32.mrf.mxu0
    %v727 = vadd.f32 %v686, %v726
    %728 = vmatmul.f32.gmra.mxu0 %v552
    %v729 = vpop.f32.mrf.mxu0
    %v730 = vadd.f32 %v686, %v729
    %731 = vmatmul.f32.gmra.mxu0 %v556
    %v732 = vpop.f32.mrf.mxu0
    %v733 = vadd.f32 %v686, %v732
    %734 = vmatmul.f32.gmra.mxu0 %v560
    %v735 = vpop.f32.mrf.mxu0
    %v736 = vadd.f32 %v686, %v735
    %737 = vmatmul.f32.gmra.mxu0 %v564
    %v738 = vpop.f32.mrf.mxu0
    %v739 = vadd.f32 %v686, %v738
    %740 = vmatmul.f32.gmra.mxu0 %v568
    %v741 = vpop.f32.mrf.mxu0
    %v742 = vadd.f32 %v686, %v741
    %743 = vmatmul.f32.gmra.mxu0 %v572
    %v744 = vpop.f32.mrf.mxu0
    %v745 = vadd.f32 %v686, %v744
    %746 = vmatmul.f32.gmra.mxu0 %v576
    %v747 = vpop.f32.mrf.mxu0
    %v748 = vadd.f32 %v686, %v747
    %749 = vmatmul.f32.gmra.mxu0 %v580
    %v750 = vpop.f32.mrf.mxu0
    %v751 = vadd.f32 %v686, %v750
    %752 = vmatmul.f32.gmra.mxu0 %v584
    %v753 = vpop.f32.mrf.mxu0
    %v754 = vadd.f32 %v686, %v753
    %755 = vmatmul.f32.gmra.mxu0 %v588
    %v756 = vpop.f32.mrf.mxu0
    %v757 = vadd.f32 %v686, %v756
    %758 = vmatmul.f32.gmra.mxu0 %v592
    %v759 = vpop.f32.mrf.mxu0
    %v760 = vadd.f32 %v686, %v759
    %761 = vmatmul.f32.gmra.mxu0 %v596
    %v762 = vpop.f32.mrf.mxu0
    %v763 = vadd.f32 %v686, %v762
    %764 = vmatmul.f32.gmra.mxu0 %v600
    %v765 = vpop.f32.mrf.mxu0
    %v766 = vadd.f32 %v686, %v765
    %767 = vmatmul.f32.gmra.mxu0 %v604
    %v768 = vpop.f32.mrf.mxu0
    %v769 = vadd.f32 %v686, %v768
    %770 = vmatmul.f32.gmra.mxu0 %v608
    %v771 = vpop.f32.mrf.mxu0
    %v772 = vadd.f32 %v686, %v771
    %773 = vmatmul.f32.gmra.mxu0 %v612
    %v774 = vpop.f32.mrf.mxu0
    %v775 = vadd.f32 %v686, %v774
    %776 = vmatmul.f32.gmra.mxu0 %v616
    %v777 = vpop.f32.mrf.mxu0
    %v778 = vadd.f32 %v686, %v777
    %779 = vdwg.mxu0
    %780 = vmatpush.msra.mxu0 %v651
    %781 = vmatpush.msra.mxu0 %v650
    %782 = vmatpush.msra.mxu0 %v649
    %783 = vmatpush.msra.mxu0 %v648
    %784 = vmatpush.msra.mxu0 %v647
    %785 = vmatpush.msra.mxu0 %v646
    %786 = vmatpush.msra.mxu0 %v645
    %787 = vmatpush.msra.mxu0 %v644
    %788 = vmatpush.msra.mxu0 %v643
    %789 = vmatpush.msra.mxu0 %v642
    %790 = vmatpush.msra.mxu0 %v641
    %791 = vmatpush.msra.mxu0 %v640
    %792 = vmatpush.msra.mxu0 %v639
    %793 = vmatpush.msra.mxu0 %v638
    %794 = vmatpush.msra.mxu0 %v637
    %795 = vmatpush.msra.mxu0 %v636
    %796 = vmatmul.f32.gmra.mxu0 %v521
    %v797 = vpop.f32.mrf.mxu0
    %v798 = vadd.f32 %v706, %v797
    %799 = vmatmul.f32.gmra.mxu0 %v525
    %v800 = vpop.f32.mrf.mxu0
    %v801 = vadd.f32 %v709, %v800
    %802 = vmatmul.f32.gmra.mxu0 %v529
    %v803 = vpop.f32.mrf.mxu0
    %v804 = vadd.f32 %v712, %v803
    %805 = vmatmul.f32.gmra.mxu0 %v533
    %v806 = vpop.f32.mrf.mxu0
    %v807 = vadd.f32 %v715, %v806
    %808 = vmatmul.f32.gmra.mxu0 %v537
    %v809 = vpop.f32.mrf.mxu0
    %v810 = vadd.f32 %v718, %v809
    %811 = vmatmul.f32.gmra.mxu0 %v541
    %v812 = vpop.f32.mrf.mxu0
    %v813 = vadd.f32 %v721, %v812
    %814 = vmatmul.f32.gmra.mxu0 %v545
    %v815 = vpop.f32.mrf.mxu0
    %v816 = vadd.f32 %v724, %v815
    %817 = vmatmul.f32.gmra.mxu0 %v549
    %v818 = vpop.f32.mrf.mxu0
    %v819 = vadd.f32 %v727, %v818
    %820 = vmatmul.f32.gmra.mxu0 %v553
    %v821 = vpop.f32.mrf.mxu0
    %v822 = vadd.f32 %v730, %v821
    %823 = vmatmul.f32.gmra.mxu0 %v557
    %v824 = vpop.f32.mrf.mxu0
    %v825 = vadd.f32 %v733, %v824
    %826 = vmatmul.f32.gmra.mxu0 %v561
    %v827 = vpop.f32.mrf.mxu0
    %v828 = vadd.f32 %v736, %v827
    %829 = vmatmul.f32.gmra.mxu0 %v565
    %v830 = vpop.f32.mrf.mxu0
    %v831 = vadd.f32 %v739, %v830
    %832 = vmatmul.f32.gmra.mxu0 %v569
    %v833 = vpop.f32.mrf.mxu0
    %v834 = vadd.f32 %v742, %v833
    %835 = vmatmul.f32.gmra.mxu0 %v573
    %v836 = vpop.f32.mrf.mxu0
    %v837 = vadd.f32 %v745, %v836
    %838 = vmatmul.f32.gmra.mxu0 %v577
    %v839 = vpop.f32.mrf.mxu0
    %v840 = vadd.f32 %v748, %v839
    %841 = vmatmul.f32.gmra.mxu0 %v581
    %v842 = vpop.f32.mrf.mxu0
    %v843 = vadd.f32 %v751, %v842
    %844 = vmatmul.f32.gmra.mxu0 %v585
    %v845 = vpop.f32.mrf.mxu0
    %v846 = vadd.f32 %v754, %v845
    %847 = vmatmul.f32.gmra.mxu0 %v589
    %v848 = vpop.f32.mrf.mxu0
    %v849 = vadd.f32 %v757, %v848
    %850 = vmatmul.f32.gmra.mxu0 %v593
    %v851 = vpop.f32.mrf.mxu0
    %v852 = vadd.f32 %v760, %v851
    %853 = vmatmul.f32.gmra.mxu0 %v597
    %v854 = vpop.f32.mrf.mxu0
    %v855 = vadd.f32 %v763, %v854
    %856 = vmatmul.f32.gmra.mxu0 %v601
    %v857 = vpop.f32.mrf.mxu0
    %v858 = vadd.f32 %v766, %v857
    %859 = vmatmul.f32.gmra.mxu0 %v605
    %v860 = vpop.f32.mrf.mxu0
    %v861 = vadd.f32 %v769, %v860
    %862 = vmatmul.f32.gmra.mxu0 %v609
    %v863 = vpop.f32.mrf.mxu0
    %v864 = vadd.f32 %v772, %v863
    %865 = vmatmul.f32.gmra.mxu0 %v613
    %v866 = vpop.f32.mrf.mxu0
    %v867 = vadd.f32 %v775, %v866
    %868 = vmatmul.f32.gmra.mxu0 %v617
    %v869 = vpop.f32.mrf.mxu0
    %v870 = vadd.f32 %v778, %v869
    %871 = vdwg.mxu0
    %872 = vmatpush.msra.mxu0 %v667
    %873 = vmatpush.msra.mxu0 %v666
    %874 = vmatpush.msra.mxu0 %v665
    %875 = vmatpush.msra.mxu0 %v664
    %876 = vmatpush.msra.mxu0 %v663
    %877 = vmatpush.msra.mxu0 %v662
    %878 = vmatpush.msra.mxu0 %v661
    %879 = vmatpush.msra.mxu0 %v660
    %880 = vmatpush.msra.mxu0 %v659
    %881 = vmatpush.msra.mxu0 %v658
    %882 = vmatpush.msra.mxu0 %v657
    %883 = vmatpush.msra.mxu0 %v656
    %884 = vmatpush.msra.mxu0 %v655
    %885 = vmatpush.msra.mxu0 %v654
    %886 = vmatpush.msra.mxu0 %v653
    %887 = vmatpush.msra.mxu0 %v652
    %888 = vmatmul.f32.gmra.mxu0 %v522
    %v889 = vpop.f32.mrf.mxu0
    %v890 = vadd.f32 %v798, %v889
    %891 = vmatmul.f32.gmra.mxu0 %v526
    %v892 = vpop.f32.mrf.mxu0
    %v893 = vadd.f32 %v801, %v892
    %894 = vmatmul.f32.gmra.mxu0 %v530
    %v895 = vpop.f32.mrf.mxu0
    %v896 = vadd.f32 %v804, %v895
    %897 = vmatmul.f32.gmra.mxu0 %v534
    %v898 = vpop.f32.mrf.mxu0
    %v899 = vadd.f32 %v807, %v898
    %900 = vmatmul.f32.gmra.mxu0 %v538
    %v901 = vpop.f32.mrf.mxu0
    %v902 = vadd.f32 %v810, %v901
    %903 = vmatmul.f32.gmra.mxu0 %v542
    %v904 = vpop.f32.mrf.mxu0
    %v905 = vadd.f32 %v813, %v904
    %906 = vmatmul.f32.gmra.mxu0 %v546
    %v907 = vpop.f32.mrf.mxu0
    %v908 = vadd.f32 %v816, %v907
    %909 = vmatmul.f32.gmra.mxu0 %v550
    %v910 = vpop.f32.mrf.mxu0
    %v911 = vadd.f32 %v819, %v910
    %912 = vmatmul.f32.gmra.mxu0 %v554
    %v913 = vpop.f32.mrf.mxu0
    %v914 = vadd.f32 %v822, %v913
    %915 = vmatmul.f32.gmra.mxu0 %v558
    %v916 = vpop.f32.mrf.mxu0
    %v917 = vadd.f32 %v825, %v916
    %918 = vmatmul.f32.gmra.mxu0 %v562
    %v919 = vpop.f32.mrf.mxu0
    %v920 = vadd.f32 %v828, %v919
    %921 = vmatmul.f32.gmra.mxu0 %v566
    %v922 = vpop.f32.mrf.mxu0
    %v923 = vadd.f32 %v831, %v922
    %924 = vmatmul.f32.gmra.mxu0 %v570
    %v925 = vpop.f32.mrf.mxu0
    %v926 = vadd.f32 %v834, %v925
    %927 = vmatmul.f32.gmra.mxu0 %v574
    %v928 = vpop.f32.mrf.mxu0
    %v929 = vadd.f32 %v837, %v928
    %930 = vmatmul.f32.gmra.mxu0 %v578
    %v931 = vpop.f32.mrf.mxu0
    %v932 = vadd.f32 %v840, %v931
    %933 = vmatmul.f32.gmra.mxu0 %v582
    %v934 = vpop.f32.mrf.mxu0
    %v935 = vadd.f32 %v843, %v934
    %936 = vmatmul.f32.gmra.mxu0 %v586
    %v937 = vpop.f32.mrf.mxu0
    %v938 = vadd.f32 %v846, %v937
    %939 = vmatmul.f32.gmra.mxu0 %v590
    %v940 = vpop.f32.mrf.mxu0
    %v941 = vadd.f32 %v849, %v940
    %942 = vmatmul.f32.gmra.mxu0 %v594
    %v943 = vpop.f32.mrf.mxu0
    %v944 = vadd.f32 %v852, %v943
    %945 = vmatmul.f32.gmra.mxu0 %v598
    %v946 = vpop.f32.mrf.mxu0
    %v947 = vadd.f32 %v855, %v946
    %948 = vmatmul.f32.gmra.mxu0 %v602
    %v949 = vpop.f32.mrf.mxu0
    %v950 = vadd.f32 %v858, %v949
    %951 = vmatmul.f32.gmra.mxu0 %v606
    %v952 = vpop.f32.mrf.mxu0
    %v953 = vadd.f32 %v861, %v952
    %954 = vmatmul.f32.gmra.mxu0 %v610
    %v955 = vpop.f32.mrf.mxu0
    %v956 = vadd.f32 %v864, %v955
    %957 = vmatmul.f32.gmra.mxu0 %v614
    %v958 = vpop.f32.mrf.mxu0
    %v959 = vadd.f32 %v867, %v958
    %960 = vmatmul.f32.gmra.mxu0 %v618
    %v961 = vpop.f32.mrf.mxu0
    %v962 = vadd.f32 %v870, %v961
    %963 = vdwg.mxu0
    %964 = vmatpush.msra.mxu0 %v683
    %965 = vmatpush.msra.mxu0 %v682
    %966 = vmatpush.msra.mxu0 %v681
    %967 = vmatpush.msra.mxu0 %v680
    %968 = vmatpush.msra.mxu0 %v679
    %969 = vmatpush.msra.mxu0 %v678
    %970 = vmatpush.msra.mxu0 %v677
    %971 = vmatpush.msra.mxu0 %v676
    %972 = vmatpush.msra.mxu0 %v675
    %973 = vmatpush.msra.mxu0 %v674
    %974 = vmatpush.msra.mxu0 %v673
    %975 = vmatpush.msra.mxu0 %v672
    %976 = vmatpush.msra.mxu0 %v671
    %977 = vmatpush.msra.mxu0 %v670
    %978 = vmatpush.msra.mxu0 %v669
    %979 = vmatpush.msra.mxu0 %v668
    %980 = vmatmul.f32.gmra.mxu0 %v523
    %v981 = vpop.f32.mrf.mxu0
    %v982 = vadd.f32 %v890, %v981
    %983 = vmatmul.f32.gmra.mxu0 %v527
    %v984 = vpop.f32.mrf.mxu0
    %v985 = vadd.f32 %v893, %v984
    %986 = vmatmul.f32.gmra.mxu0 %v531
    %v987 = vpop.f32.mrf.mxu0
    %v988 = vadd.f32 %v896, %v987
    %989 = vmatmul.f32.gmra.mxu0 %v535
    %v990 = vpop.f32.mrf.mxu0
    %v991 = vadd.f32 %v899, %v990
    %992 = vmatmul.f32.gmra.mxu0 %v539
    %v993 = vpop.f32.mrf.mxu0
    %v994 = vadd.f32 %v902, %v993
    %995 = vmatmul.f32.gmra.mxu0 %v543
    %v996 = vpop.f32.mrf.mxu0
    %v997 = vadd.f32 %v905, %v996
    %998 = vmatmul.f32.gmra.mxu0 %v547
    %v999 = vpop.f32.mrf.mxu0
    %v1000 = vadd.f32 %v908, %v999
    %1001 = vmatmul.f32.gmra.mxu0 %v551
    %v1002 = vpop.f32.mrf.mxu0
    %v1003 = vadd.f32 %v911, %v1002
    %1004 = vmatmul.f32.gmra.mxu0 %v555
    %v1005 = vpop.f32.mrf.mxu0
    %v1006 = vadd.f32 %v914, %v1005
    %1007 = vmatmul.f32.gmra.mxu0 %v559
    %v1008 = vpop.f32.mrf.mxu0
    %v1009 = vadd.f32 %v917, %v1008
    %1010 = vmatmul.f32.gmra.mxu0 %v563
    %v1011 = vpop.f32.mrf.mxu0
    %v1012 = vadd.f32 %v920, %v1011
    %1013 = vmatmul.f32.gmra.mxu0 %v567
    %v1014 = vpop.f32.mrf.mxu0
    %v1015 = vadd.f32 %v923, %v1014
    %1016 = vmatmul.f32.gmra.mxu0 %v571
    %v1017 = vpop.f32.mrf.mxu0
    %v1018 = vadd.f32 %v926, %v1017
    %1019 = vmatmul.f32.gmra.mxu0 %v575
    %v1020 = vpop.f32.mrf.mxu0
    %v1021 = vadd.f32 %v929, %v1020
    %1022 = vmatmul.f32.gmra.mxu0 %v579
    %v1023 = vpop.f32.mrf.mxu0
    %v1024 = vadd.f32 %v932, %v1023
    %1025 = vmatmul.f32.gmra.mxu0 %v583
    %v1026 = vpop.f32.mrf.mxu0
    %v1027 = vadd.f32 %v935, %v1026
    %1028 = vmatmul.f32.gmra.mxu0 %v587
    %v1029 = vpop.f32.mrf.mxu0
    %v1030 = vadd.f32 %v938, %v1029
    %1031 = vmatmul.f32.gmra.mxu0 %v591
    %v1032 = vpop.f32.mrf.mxu0
    %v1033 = vadd.f32 %v941, %v1032
    %1034 = vmatmul.f32.gmra.mxu0 %v595
    %v1035 = vpop.f32.mrf.mxu0
    %v1036 = vadd.f32 %v944, %v1035
    %1037 = vmatmul.f32.gmra.mxu0 %v599
    %v1038 = vpop.f32.mrf.mxu0
    %v1039 = vadd.f32 %v947, %v1038
    %1040 = vmatmul.f32.gmra.mxu0 %v603
    %v1041 = vpop.f32.mrf.mxu0
    %v1042 = vadd.f32 %v950, %v1041
    %1043 = vmatmul.f32.gmra.mxu0 %v607
    %v1044 = vpop.f32.mrf.mxu0
    %v1045 = vadd.f32 %v953, %v1044
    %1046 = vmatmul.f32.gmra.mxu0 %v611
    %v1047 = vpop.f32.mrf.mxu0
    %v1048 = vadd.f32 %v956, %v1047
    %1049 = vmatmul.f32.gmra.mxu0 %v615
    %v1050 = vpop.f32.mrf.mxu0
    %v1051 = vadd.f32 %v959, %v1050
    %1052 = vmatmul.f32.gmra.mxu0 %v619
    %v1053 = vpop.f32.mrf.mxu0
    %v1054 = vadd.f32 %v962, %v1053
    %1055 = vdwg.mxu0
    %1056 = vst [vmem:[#allocation5] sm:$0xff] %v982
    %1057 = vst [vmem:[#allocation5 + $0x8] sm:$0xff] %v985
    %1058 = vst [vmem:[#allocation5 + $0x10] sm:$0xff] %v988
    %1059 = vst [vmem:[#allocation5 + $0x18] sm:$0xff] %v991
    %1060 = vst [vmem:[#allocation5 + $0x20] sm:$0xff] %v994
    %1061 = vst [vmem:[#allocation5 + $0x28] sm:$0xff] %v997
    %1062 = vst [vmem:[#allocation5 + $0x30] sm:$0xff] %v1000
    %1063 = vst [vmem:[#allocation5 + $0x38] sm:$0xff] %v1003
    %1064 = vst [vmem:[#allocation5 + $0x40] sm:$0xff] %v1006
    %1065 = vst [vmem:[#allocation5 + $0x48] sm:$0xff] %v1009
    %1066 = vst [vmem:[#allocation5 + $0x50] sm:$0xff] %v1012
    %1067 = vst [vmem:[#allocation5 + $0x58] sm:$0xff] %v1015
    %1068 = vst [vmem:[#allocation5 + $0x60] sm:$0xff] %v1018
    %1069 = vst [vmem:[#allocation5 + $0x68] sm:$0xff] %v1021
    %1070 = vst [vmem:[#allocation5 + $0x70] sm:$0xff] %v1024
    %1071 = vst [vmem:[#allocation5 + $0x78] sm:$0xff] %v1027
    %1072 = vst [vmem:[#allocation5 + $0x80] sm:$0xff] %v1030
    %1073 = vst [vmem:[#allocation5 + $0x88] sm:$0xff] %v1033
    %1074 = vst [vmem:[#allocation5 + $0x90] sm:$0xff] %v1036
    %1075 = vst [vmem:[#allocation5 + $0x98] sm:$0xff] %v1039
    %1076 = vst [vmem:[#allocation5 + $0xa0] sm:$0xff] %v1042
    %1077 = vst [vmem:[#allocation5 + $0xa8] sm:$0xff] %v1045
    %1078 = vst [vmem:[#allocation5 + $0xb0] sm:$0xff] %v1048
    %1079 = vst [vmem:[#allocation5 + $0xb8] sm:$0xff] %v1051
    %1080 = vst [vmem:[#allocation5 + $0xc0] sm:$0xff] %v1054
    // Predicated region
    $region26: #{pgn_forward_padded.1} parent=1 // pred_check
      _
    $region27: #{pgn_forward_padded.1} parent=1 // pred_check_branch
      %1082 = sbr.rel (0) target = $region29
    $region28: #{pgn_forward_padded.1} parent=1 // pred_region
      %1084 = vsyncadd [#allocation4], 0
      %s1085 = sshll.u32 [#allocation5], 4
      %s1086 = int_to_ptr.vmem [resolvable:$true] %s1085
      %s1087 = sshll.u32 %s5, 4
      %s1088 = int_to_ptr.hbm [resolvable:$true] %s1087
      %1093 = dma.vmem_to_hbm [thread:$0]  %s1086, 3200, %s1088, [#allocation4], 128, 128, 8
    $region29: #{pgn_forward_padded.1} parent=1 // pred_fallthru
      _
    // Predicated region
    $region30: #{pgn_forward_padded.1} parent=1 // pred_check
      _
    $region31: #{pgn_forward_padded.1} parent=1 // pred_check_branch
      %1095 = sbr.rel (0) target = $region33
    $region32: #{pgn_forward_padded.1} parent=1 // pred_region
      %1097 = dma.done [#allocation4], 3200
    $region33: #{pgn_forward_padded.1} parent=1 // pred_fallthru
      _
    %1098 = vsyncpa [#allocation3], 1
    %1099 = vsyncpa [#allocation4], 1

</llo_original>
